<compile_context>
chip_gen: v5e
topology: v5e:2x2
jax: 0.10.0
libtpu: 0.0.40
codegen_flags: <defaults>
</compile_context>

<pallas_src>
import jax
import jax.numpy as jnp
from jax.experimental import pallas as pl
from jax.experimental.pallas import tpu as pltpu


def bahdanau_kernel(enc_ref, hid_ref, we_ref, wd_ref, b_ref, wa_ref,
                    z_ref, alpha_ref):
    tb, L, E = enc_ref.shape
    A = we_ref.shape[1]
    f32 = jnp.float32

    enc = enc_ref[...]                                   # native dtype into the MXU

    # Encoder projection: one fused (tb*L, E) @ (E, A) MXU matmul per step.
    # (When L is a multiple of the 8-row sublane tile this reshape is a pure view.)
    enc_att = jnp.dot(enc.reshape(tb * L, E), we_ref[...],
                      preferred_element_type=f32).reshape(tb, L, A)
    # Decoder projection: one (tb, D) @ (D, A) matmul; folded (be + bd) bias is
    # added once on the small (tb, A) tensor.
    dec_att = jnp.dot(hid_ref[...], wd_ref[...],
                      preferred_element_type=f32) + b_ref[...]       # (tb, A)

    ed = jnp.tanh(enc_att + dec_att[:, None, :])                     # (tb, L, A)

    # Scores: VPU multiply + lane reduce against the (1, A) attention row
    # (`ba` cancels in the softmax and is dropped).
    scores = jnp.sum(ed * wa_ref[...], axis=-1)                      # (tb, L)

    # Softmax over the sequence axis (per batch row).
    m = jnp.max(scores, axis=-1, keepdims=True)                      # (tb, 1)
    p = jnp.exp(scores - m)                                          # (tb, L)
    denom = jnp.sum(p, axis=-1, keepdims=True)                       # (tb, 1)
    inv = pl.reciprocal(denom, approx=True)                          # EUP slot
    inv = inv * (2.0 - denom * inv)                                  # Newton -> f32-exact
    alpha = p * inv                                                  # (tb, L)

    if L >= 32:
        # MXU is idle after the projections: batched (1,L)@(L,E) contraction.
        z = jax.lax.dot_general(
            alpha.astype(enc.dtype), enc,
            dimension_numbers=(((1,), (1,)), ((0,), (0,))),
            preferred_element_type=f32)                              # (tb, E)
    else:
        # Tiny L: broadcast-multiply + cross-sublane reduce is cheaper than
        # spinning up an MXU pass.
        z = jnp.sum(enc.astype(f32) * alpha[:, :, None], axis=1)     # (tb, E)

    z_ref[...] = z.astype(z_ref.dtype)
    alpha_ref[...] = alpha.astype(alpha_ref.dtype)


def _vmem_capacity_bytes():
    try:
        return int(pltpu.get_tpu_info().vmem_capacity_bytes)
    except Exception:
        return 64 * 1024 * 1024          # conservative fallback: v7x per-TC VMEM


def bahdanau_attention(encoder_output, hidden_states, params, *,
                       block_b=None, enc_buffers=None):
    B, L, E = encoder_output.shape
    _, D = hidden_states.shape
    A = params["we"].shape[1]

    enc_bytes = jnp.dtype(encoder_output.dtype).itemsize
    hid_bytes = jnp.dtype(hidden_states.dtype).itemsize
    out_bytes = jnp.dtype(encoder_output.dtype).itemsize

    # Per-batch-row VMEM cost: double-buffered input/output tiles plus the f32
    # in-kernel intermediates (enc copy for the VPU context path, tanh tensor,
    # softmax temps).
    per_row = (
        2 * (L * E * enc_bytes + D * hid_bytes)   # double-buffered input tiles
        + 2 * (E * out_bytes + L * 4)             # double-buffered output tiles
        + L * E * 4                               # f32 enc copy (VPU context path)
        + 2 * L * A * 4                           # enc_att / tanh intermediate
        + 6 * L * 4 + 2 * E * 4                   # scores / exp / alpha / z temps
    )
    vmem = _vmem_capacity_bytes()
    # ~3/4 of physical VMEM, capped: ~48 MiB scoped on v7x (64 MiB), up to
    # 100 MiB on v5e/v6e (128 MiB).
    budget = min(vmem * 3 // 4, 100 * 1024 * 1024)

    if block_b is None:
        # Generation-sized tile: fill the budget, but beyond ~1K rows/step the
        # per-step overhead is already fully amortized.
        block_b = int(max(8, min(budget // max(per_row, 1), 1024)))

    if block_b >= B:
        tb = B                                   # single step; block == full array
    else:
        tb = max(8, block_b - block_b % 8)       # (8,·) sublane rule for 2-D blocks
    n_steps = pl.cdiv(B, tb)                     # ragged last block, no padding

    weight_bytes = (E * A * jnp.dtype(params["we"].dtype).itemsize
                    + D * A * jnp.dtype(params["wd"].dtype).itemsize
                    + 4 * A * 4)
    vmem_limit = int(min(vmem,
                         max(tb * per_row + 2 * weight_bytes + (4 << 20),
                             32 << 20)))

    # Fold the two pre-tanh biases into one (1, A) add; pass `wa` as a row.
    bias = (params["be"] + params["bd"]).reshape(1, A).astype(jnp.float32)
    wa_row = params["wa"].reshape(1, A).astype(jnp.float32)

    enc_spec_kwargs = {}
    if enc_buffers is not None:
        # Optional deeper buffering for v5e's lower HBM BW when the enc fetch is
        # still exposed after enlarging tb (do not blindly use on v7x's 64 MiB).
        enc_spec_kwargs["pipeline_mode"] = pl.Buffered(enc_buffers)

    z, alpha = pl.pallas_call(
        bahdanau_kernel,
        out_shape=(
            jax.ShapeDtypeStruct((B, E), encoder_output.dtype),
            jax.ShapeDtypeStruct((B, L), jnp.float32),
        ),
        grid_spec=pltpu.PrefetchScalarGridSpec(
            num_scalar_prefetch=0,
            grid=(n_steps,),
            in_specs=[
                pl.BlockSpec((tb, L, E), lambda b: (b, 0, 0),
                             **enc_spec_kwargs),                 # encoder_output
                pl.BlockSpec((tb, D), lambda b: (b, 0)),         # hidden_states
                pl.BlockSpec((E, A), lambda b: (0, 0)),          # we
                pl.BlockSpec((D, A), lambda b: (0, 0)),          # wd
                pl.BlockSpec((1, A), lambda b: (0, 0)),          # be + bd (folded)
                pl.BlockSpec((1, A), lambda b: (0, 0)),          # wa as a row
            ],
            out_specs=[
                pl.BlockSpec((tb, E), lambda b: (b, 0)),         # z
                pl.BlockSpec((tb, L), lambda b: (b, 0)),         # alpha
            ],
        ),
        compiler_params=pltpu.CompilerParams(
            dimension_semantics=("parallel",),
            vmem_limit_bytes=vmem_limit,
        ),
    )(encoder_output, hidden_states, params["we"], params["wd"], bias, wa_row)

    return z, alpha


def reference(encoder_output, hidden_states, params):
    # Pure-JAX reference mirroring the PyTorch forward (including ba, which
    # cancels in the softmax).
    enc_att = encoder_output @ params["we"] + params["be"]           # (B, L, A)
    dec_att = hidden_states @ params["wd"] + params["bd"]            # (B, A)
    ed = jnp.tanh(enc_att + dec_att[:, None, :])                     # (B, L, A)
    scores = (ed @ params["wa"])[..., 0] + params["ba"][0]           # (B, L)
    alpha = jax.nn.softmax(scores, axis=1)                           # (B, L)
    z = jnp.sum(encoder_output * alpha[..., None], axis=1)           # (B, E)
    return z, alpha


def _make_inputs(key, B, L, E, D, A):
    k_enc, k_hid, k1, k2, k3, k4, k5, k6 = jax.random.split(key, 8)
    encoder_output = jax.random.normal(k_enc, (B, L, E), jnp.float32)
    hidden_states = jax.random.normal(k_hid, (B, D), jnp.float32)
    params = {
        "we": jax.random.normal(k1, (E, A), jnp.float32) * 0.1,
        "be": jax.random.normal(k2, (A,), jnp.float32) * 0.1,
        "wd": jax.random.normal(k3, (D, A), jnp.float32) * 0.1,
        "bd": jax.random.normal(k4, (A,), jnp.float32) * 0.1,
        "wa": jax.random.normal(k5, (A, 1), jnp.float32) * 0.1,
        "ba": jax.random.normal(k6, (1,), jnp.float32) * 0.1,
    }
    return encoder_output, hidden_states, params


if __name__ == "__main__":
    E, D, A = 32, 24, 16            # encoder_dim, decoder_dim, attention_dim
    L = 8                           # sequence length

    key = jax.random.PRNGKey(0)
    k_small, k_big = jax.random.split(key)

    # Small batch, auto (VMEM-derived) tile: single grid step, tb == B.
    enc, hid, params = _make_inputs(k_small, 2, L, E, D, A)
    z, alpha = bahdanau_attention(enc, hid, params)
    z = jax.block_until_ready(z)
    alpha = jax.block_until_ready(alpha)
    z_ref, alpha_ref = reference(enc, hid, params)
    assert jnp.allclose(z, z_ref, atol=1e-5, rtol=1e-5), "z mismatch (B=2)"
    assert jnp.allclose(alpha, alpha_ref, atol=1e-5, rtol=1e-5), "alpha mismatch (B=2)"

    # Larger batch with an explicit small tile: exercises the multi-step ragged
    # grid (B=20, tb=8 -> 3 steps, last block has 4 valid rows, no wrapper pad).
    enc, hid, params = _make_inputs(k_big, 20, L, E, D, A)
    z, alpha = bahdanau_attention(enc, hid, params, block_b=8)
    z = jax.block_until_ready(z)
    alpha = jax.block_until_ready(alpha)
    z_ref, alpha_ref = reference(enc, hid, params)
    assert jnp.allclose(z, z_ref, atol=1e-5, rtol=1e-5), "z mismatch (B=20, tb=8)"
    assert jnp.allclose(alpha, alpha_ref, atol=1e-5, rtol=1e-5), "alpha mismatch (B=20, tb=8)"

    # Same batch with the auto VMEM-derived tile (single step at these shapes).
    z, alpha = bahdanau_attention(enc, hid, params)
    z = jax.block_until_ready(z)
    alpha = jax.block_until_ready(alpha)
    assert jnp.allclose(z, z_ref, atol=1e-5, rtol=1e-5), "z mismatch (B=20, auto)"
    assert jnp.allclose(alpha, alpha_ref, atol=1e-5, rtol=1e-5), "alpha mismatch (B=20, auto)"

    print("KERNEL_OK")
</pallas_src>

<mosaic_0001>
module attributes {stable_mosaic.version = 11 : i64} {
  func.func @bahdanau_kernel(%arg0: i32, %arg1: memref<2x8x32xf32, #tpu.memory_space<vmem>>, %arg2: memref<2x24xf32, #tpu.memory_space<vmem>>, %arg3: memref<32x16xf32, #tpu.memory_space<vmem>>, %arg4: memref<24x16xf32, #tpu.memory_space<vmem>>, %arg5: memref<1x16xf32, #tpu.memory_space<vmem>>, %arg6: memref<1x16xf32, #tpu.memory_space<vmem>>, %arg7: memref<2x32xf32, #tpu.memory_space<vmem>>, %arg8: memref<2x8xf32, #tpu.memory_space<vmem>>) attributes {dimension_semantics = [#tpu.dimension_semantics<parallel>], iteration_bounds = array<i64: 1>, scalar_prefetch = 0 : i64, scratch_operands = 0 : i64, tpu.core_type = #tpu.core_type<tc>, window_params = [{transform_indices = @transform_0, window_bounds = array<i64: 2, 8, 32>}, {transform_indices = @transform_1, window_bounds = array<i64: 2, 24>}, {pipeline_mode = #tpu.pipeline_mode<synchronous>, transform_indices = @transform_2, window_bounds = array<i64: 32, 16>}, {pipeline_mode = #tpu.pipeline_mode<synchronous>, transform_indices = @transform_3, window_bounds = array<i64: 24, 16>}, {pipeline_mode = #tpu.pipeline_mode<synchronous>, transform_indices = @transform_4, window_bounds = array<i64: 1, 16>}, {pipeline_mode = #tpu.pipeline_mode<synchronous>, transform_indices = @transform_5, window_bounds = array<i64: 1, 16>}, {transform_indices = @transform_6, window_bounds = array<i64: 2, 32>}, {transform_indices = @transform_7, window_bounds = array<i64: 2, 8>}]} {
    %c0 = arith.constant 0 : index
    %c0_0 = arith.constant 0 : index
    %c0_1 = arith.constant 0 : index
    %0 = vector.load %arg1[%c0, %c0_0, %c0_1] : memref<2x8x32xf32, #tpu.memory_space<vmem>>, vector<2x8x32xf32>
    %1 = vector.shape_cast %0 : vector<2x8x32xf32> to vector<16x32xf32>
    %c0_2 = arith.constant 0 : index
    %c0_3 = arith.constant 0 : index
    %2 = vector.load %arg3[%c0_2, %c0_3] : memref<32x16xf32, #tpu.memory_space<vmem>>, vector<32x16xf32>
    %cst = arith.constant dense<0.000000e+00> : vector<16x16xf32>
    %3 = tpu.matmul %1, %2, %cst {dimension_numbers = #tpu.dot_dimension_numbers<[1], [0], [0], [1], [0, 0, 1, 1], [], []>} : vector<16x32xf32>, vector<32x16xf32>, vector<16x16xf32> -> vector<16x16xf32>
    %4 = vector.shape_cast %3 : vector<16x16xf32> to vector<2x8x16xf32>
    %c0_4 = arith.constant 0 : index
    %c0_5 = arith.constant 0 : index
    %5 = vector.load %arg2[%c0_4, %c0_5] : memref<2x24xf32, #tpu.memory_space<vmem>>, vector<2x24xf32>
    %c0_6 = arith.constant 0 : index
    %c0_7 = arith.constant 0 : index
    %6 = vector.load %arg4[%c0_6, %c0_7] : memref<24x16xf32, #tpu.memory_space<vmem>>, vector<24x16xf32>
    %cst_8 = arith.constant dense<0.000000e+00> : vector<2x16xf32>
    %7 = tpu.matmul %5, %6, %cst_8 {dimension_numbers = #tpu.dot_dimension_numbers<[1], [0], [0], [1], [0, 0, 1, 1], [], []>} : vector<2x24xf32>, vector<24x16xf32>, vector<2x16xf32> -> vector<2x16xf32>
    %c0_9 = arith.constant 0 : index
    %c0_10 = arith.constant 0 : index
    %8 = vector.load %arg5[%c0_9, %c0_10] : memref<1x16xf32, #tpu.memory_space<vmem>>, vector<1x16xf32>
    %9 = vector.broadcast %8 : vector<1x16xf32> to vector<2x16xf32>
    %10 = arith.addf %7, %9 : vector<2x16xf32>
    %11 = vector.shape_cast %10 : vector<2x16xf32> to vector<2x1x16xf32>
    %12 = vector.broadcast %11 : vector<2x1x16xf32> to vector<2x8x16xf32>
    %13 = arith.addf %4, %12 : vector<2x8x16xf32>
    %14 = math.tanh %13 : vector<2x8x16xf32>
    %c0_11 = arith.constant 0 : index
    %c0_12 = arith.constant 0 : index
    %15 = vector.load %arg6[%c0_11, %c0_12] : memref<1x16xf32, #tpu.memory_space<vmem>>, vector<1x16xf32>
    %16 = vector.shape_cast %15 : vector<1x16xf32> to vector<1x1x16xf32>
    %17 = vector.broadcast %16 : vector<1x1x16xf32> to vector<2x8x16xf32>
    %18 = arith.mulf %14, %17 : vector<2x8x16xf32>
    %cst_13 = arith.constant dense<0.000000e+00> : vector<2x8xf32>
    %19 = vector.multi_reduction <add>, %18, %cst_13 [2] : vector<2x8x16xf32> to vector<2x8xf32>
    %cst_14 = arith.constant dense<0xFF800000> : vector<2xf32>
    %20 = vector.multi_reduction <maximumf>, %19, %cst_14 [1] : vector<2x8xf32> to vector<2xf32>
    %21 = vector.shape_cast %20 : vector<2xf32> to vector<2x1xf32>
    %22 = vector.broadcast %21 : vector<2x1xf32> to vector<2x8xf32>
    %23 = arith.subf %19, %22 : vector<2x8xf32>
    %24 = math.exp %23 : vector<2x8xf32>
    %cst_15 = arith.constant dense<0.000000e+00> : vector<2xf32>
    %25 = vector.multi_reduction <add>, %24, %cst_15 [1] : vector<2x8xf32> to vector<2xf32>
    %26 = vector.shape_cast %25 : vector<2xf32> to vector<2x1xf32>
    %27 = tpu.reciprocal %26 {approx = true} : vector<2x1xf32> -> vector<2x1xf32>
    %28 = arith.mulf %26, %27 : vector<2x1xf32>
    %cst_16 = arith.constant 2.000000e+00 : f32
    %29 = vector.broadcast %cst_16 : f32 to vector<2x1xf32>
    %30 = arith.subf %29, %28 : vector<2x1xf32>
    %31 = arith.mulf %27, %30 : vector<2x1xf32>
    %32 = vector.broadcast %31 : vector<2x1xf32> to vector<2x8xf32>
    %33 = arith.mulf %24, %32 : vector<2x8xf32>
    %34 = vector.shape_cast %33 : vector<2x8xf32> to vector<2x8x1xf32>
    %35 = vector.broadcast %34 : vector<2x8x1xf32> to vector<2x8x32xf32>
    %36 = arith.mulf %0, %35 : vector<2x8x32xf32>
    %cst_17 = arith.constant dense<0.000000e+00> : vector<2x32xf32>
    %37 = vector.multi_reduction <add>, %36, %cst_17 [1] : vector<2x8x32xf32> to vector<2x32xf32>
    %c0_18 = arith.constant 0 : index
    %c0_19 = arith.constant 0 : index
    %38 = vector.load %arg7[%c0_18, %c0_19] : memref<2x32xf32, #tpu.memory_space<vmem>>, vector<2x32xf32>
    tpu.vector_store %arg7[%c0_18, %c0_19], %37 {strides = array<i32>} : memref<2x32xf32, #tpu.memory_space<vmem>>, vector<2x32xf32>,
    %c0_20 = arith.constant 0 : index
    %c0_21 = arith.constant 0 : index
    %39 = vector.load %arg8[%c0_20, %c0_21] : memref<2x8xf32, #tpu.memory_space<vmem>>, vector<2x8xf32>
    tpu.vector_store %arg8[%c0_20, %c0_21], %33 {strides = array<i32>} : memref<2x8xf32, #tpu.memory_space<vmem>>, vector<2x8xf32>,
    return
  }
  func.func @transform_0(%arg0: i32) -> (i32, i32, i32) {
    %c0_i32 = arith.constant 0 : i32
    %c0_i32_0 = arith.constant 0 : i32
    %c0_i32_1 = arith.constant 0 : i32
    return %arg0, %c0_i32, %c0_i32_0 : i32, i32, i32
  }
  func.func @transform_1(%arg0: i32) -> (i32, i32) {
    %c0_i32 = arith.constant 0 : i32
    %c0_i32_0 = arith.constant 0 : i32
    return %arg0, %c0_i32 : i32, i32
  }
  func.func @transform_2(%arg0: i32) -> (i32, i32) {
    %c0_i32 = arith.constant 0 : i32
    %c0_i32_0 = arith.constant 0 : i32
    %c0_i32_1 = arith.constant 0 : i32
    return %c0_i32, %c0_i32_0 : i32, i32
  }
  func.func @transform_3(%arg0: i32) -> (i32, i32) {
    %c0_i32 = arith.constant 0 : i32
    %c0_i32_0 = arith.constant 0 : i32
    %c0_i32_1 = arith.constant 0 : i32
    return %c0_i32, %c0_i32_0 : i32, i32
  }
  func.func @transform_4(%arg0: i32) -> (i32, i32) {
    %c0_i32 = arith.constant 0 : i32
    %c0_i32_0 = arith.constant 0 : i32
    %c0_i32_1 = arith.constant 0 : i32
    return %c0_i32, %c0_i32_0 : i32, i32
  }
  func.func @transform_5(%arg0: i32) -> (i32, i32) {
    %c0_i32 = arith.constant 0 : i32
    %c0_i32_0 = arith.constant 0 : i32
    %c0_i32_1 = arith.constant 0 : i32
    return %c0_i32, %c0_i32_0 : i32, i32
  }
  func.func @transform_6(%arg0: i32) -> (i32, i32) {
    %c0_i32 = arith.constant 0 : i32
    %c0_i32_0 = arith.constant 0 : i32
    return %arg0, %c0_i32 : i32, i32
  }
  func.func @transform_7(%arg0: i32) -> (i32, i32) {
    %c0_i32 = arith.constant 0 : i32
    %c0_i32_0 = arith.constant 0 : i32
    return %arg0, %c0_i32 : i32, i32
  }
}

</mosaic_0001>

<llo_original>
// kernel: tpu_custom_call.1
$region0: #{tpu_custom_call.1}
  #allocation0 [shape = 'u32[]', space=smem, size = 0x4, offset = 0x4, fixed_abs, tag = 'smem constant byte address 0x4 - core index']
  #allocation1 [shape = 'u32[72,128]{1,0:T(1,128)}', space=vmem, size = 0x9000, scoped, tag = 'internal scratch']
  %s0 = inlined_call_operand.vmem [shape: f32[2,8,32], index: 0, kind: input, shape index: {}]
  %s1 = inlined_call_operand.vmem [shape: f32[2,24], index: 1, kind: input, shape index: {}]
  %s2 = inlined_call_operand.vmem [shape: f32[32,16], index: 2, kind: input, shape index: {}]
  %s3 = inlined_call_operand.vmem [shape: f32[24,16], index: 3, kind: input, shape index: {}]
  %s4 = inlined_call_operand.vmem [shape: f32[1,16], index: 4, kind: input, shape index: {}]
  %s5 = inlined_call_operand.vmem [shape: f32[1,16], index: 5, kind: input, shape index: {}]
  %s6 = inlined_call_operand.hbm [shape: f32[2,32], index: 6, kind: output, shape index: {0}]
  %s7 = inlined_call_operand.hbm [shape: f32[2,8], index: 7, kind: output, shape index: {1}]
  %8 = xla_tuple %s6, %s7
  %s9 = sld [smem:[#allocation0]]
  $region42: #{tpu_custom_call.1} parent=0
    _
  %s11 = ssub.s32 1, %s9
  %s12 = scalar_select 0, %s11, %s9
  $region1: #{tpu_custom_call.1} parent=0
    #allocation2 [shape = 'u8[1024]{0}', space=vmem, size = 0x400, scoped, tag = 'output window, operand 0, single buffered']
    #allocation3 [shape = 's32[1]{0}', space=sflag, size = 0x4, scoped, tag = 'scoped memory for tpu_custom_call.1']
    #allocation4 [shape = 'u8[1024]{0}', space=vmem, size = 0x400, scoped, tag = 'output window, operand 1, single buffered']
    #allocation5 [shape = 's32[1]{0}', space=sflag, size = 0x4, scoped, tag = 'scoped memory for tpu_custom_call.1']
    %13 = vsyncpa [#allocation3], 0
    %14 = vsyncpa [#allocation5], 0
    // Predicated region
    $region2: #{tpu_custom_call.1} parent=1 // pred_check
      _
    $region3: #{tpu_custom_call.1} parent=1 // pred_check_branch
      %16 = sbr.rel (0) target = $region5
    $region4: #{tpu_custom_call.1} parent=1 // pred_region
      _
    $region5: #{tpu_custom_call.1} parent=1 // pred_fallthru
      _
    // Predicated region
    $region6: #{tpu_custom_call.1} parent=1 // pred_check
      _
    $region7: #{tpu_custom_call.1} parent=1 // pred_check_branch
      %18 = sbr.rel (0) target = $region9
    $region8: #{tpu_custom_call.1} parent=1 // pred_region
      _
    $region9: #{tpu_custom_call.1} parent=1 // pred_fallthru
      _
    // Predicated region
    $region10: #{tpu_custom_call.1} parent=1 // pred_check
      _
    $region11: #{tpu_custom_call.1} parent=1 // pred_check_branch
      %20 = sbr.rel (0) target = $region13
    $region12: #{tpu_custom_call.1} parent=1 // pred_region
      _
    $region13: #{tpu_custom_call.1} parent=1 // pred_fallthru
      _
    // Predicated region
    $region14: #{tpu_custom_call.1} parent=1 // pred_check
      _
    $region15: #{tpu_custom_call.1} parent=1 // pred_check_branch
      %22 = sbr.rel (0) target = $region17
    $region16: #{tpu_custom_call.1} parent=1 // pred_region
      _
    $region17: #{tpu_custom_call.1} parent=1 // pred_fallthru
      _
    // Predicated region
    $region18: #{tpu_custom_call.1} parent=1 // pred_check
      _
    $region19: #{tpu_custom_call.1} parent=1 // pred_check_branch
      %24 = sbr.rel (0) target = $region21
    $region20: #{tpu_custom_call.1} parent=1 // pred_region
      _
    $region21: #{tpu_custom_call.1} parent=1 // pred_fallthru
      _
    // Predicated region
    $region22: #{tpu_custom_call.1} parent=1 // pred_check
      _
    $region23: #{tpu_custom_call.1} parent=1 // pred_check_branch
      %26 = sbr.rel (0) target = $region25
    $region24: #{tpu_custom_call.1} parent=1 // pred_region
      _
    $region25: #{tpu_custom_call.1} parent=1 // pred_fallthru
      _
    %v27 = vld [vmem:[%s0] sm:$0xff]
    %v28 = vld [vmem:[%s0 + $0x8] sm:$0xff]
    %v29 = vld [vmem:[%s2] sm:$0xff]
    %v30 = vld [vmem:[%s2 + $0x8] sm:$0xff]
    %v31 = vld [vmem:[%s2 + $0x10] sm:$0xff]
    %v32 = vld [vmem:[%s2 + $0x18] sm:$0xff]
    %vm33 = vcmask 261120
    %v35 = vsel %vm33, %v27, 0
    %v38 = vsel %vm33, %v28, 0
    %40 = vmatpush.msra.mxu0 0.0
    %41 = vmatpush.msra.mxu0 0.0
    %42 = vmatpush.msra.mxu0 0.0
    %43 = vmatpush.msra.mxu0 0.0
    %44 = vmatpush.msra.mxu0 0.0
    %45 = vmatpush.msra.mxu0 0.0
    %46 = vmatpush.msra.mxu0 0.0
    %47 = vmatpush.msra.mxu0 0.0
    %48 = vmatpush.msra.mxu0 0.0
    %49 = vmatpush.msra.mxu0 0.0
    %50 = vmatpush.msra.mxu0 0.0
    %51 = vmatpush.msra.mxu0 0.0
    %52 = vmatpush.msra.mxu0 %v32
    %53 = vmatpush.msra.mxu0 %v31
    %54 = vmatpush.msra.mxu0 %v30
    %55 = vmatpush.msra.mxu0 %v29
    %56 = vmatmul.f32.gmra.mxu0 %v35
    %v57 = vpop.f32.mrf.mxu0
    %v58 = vadd.f32 0.0, %v57
    %59 = vmatmul.f32.gmra.mxu0 %v38
    %v60 = vpop.f32.mrf.mxu0
    %v61 = vadd.f32 0.0, %v60
    %62 = vdwg.mxu0
    %v63 = vld [vmem:[%s1] sm:$0x3]
    %v64 = vld [vmem:[%s3] sm:$0xff]
    %v65 = vld [vmem:[%s3 + $0x8] sm:$0xff]
    %v66 = vld [vmem:[%s3 + $0x10] sm:$0xff]
    %v67 = vld [vmem:[%s4] sm:$0x1]
    %v69 = vperm.slane %v67, 0
    %vm71 = vcmask 195584
    %v73 = vsel %vm71, %v63, 0
    %75 = vmatpush.msra.mxu0 0.0
    %76 = vmatpush.msra.mxu0 0.0
    %77 = vmatpush.msra.mxu0 0.0
    %78 = vmatpush.msra.mxu0 0.0
    %79 = vmatpush.msra.mxu0 0.0
    %80 = vmatpush.msra.mxu0 0.0
    %81 = vmatpush.msra.mxu0 0.0
    %82 = vmatpush.msra.mxu0 0.0
    %83 = vmatpush.msra.mxu0 0.0
    %84 = vmatpush.msra.mxu0 0.0
    %85 = vmatpush.msra.mxu0 0.0
    %86 = vmatpush.msra.mxu0 0.0
    %87 = vmatpush.msra.mxu0 0.0
    %88 = vmatpush.msra.mxu0 %v66
    %89 = vmatpush.msra.mxu0 %v65
    %90 = vmatpush.msra.mxu0 %v64
    %91 = vmatmul.f32.gmra.mxu0 %v73
    %v92 = vpop.f32.mrf.mxu0
    %v93 = vadd.f32 %v69, %v92
    %94 = vdwg.mxu0
    %v96 = vrot.slane %v93, 1
    %v97 = vperm.slane %v93, 0
    %v98 = vperm.slane %v96, 0
    %v101 = vadd.f32 %v58, %v97
    %v102 = vadd.f32 %v61, %v98
    %v103 = vtanh.pop %v101
    %v104 = vtanh.pop %v102
    %v105 = vld [vmem:[%s5] sm:$0x1]
    %v107 = vperm.slane %v105, 0
    %v109 = vmul.f32 %v103, %v107
    %v110 = vmul.f32 %v104, %v107
    %vm111 = vcmask 130048
    %v112 = vsel %vm111, %v109, 0.0
    %113 = vadd.xlane.f32.xlu0 %v112
    %v114 = vpop.xlane.xlu0 %113
    %v115 = vsel %vm111, %v110, 0.0
    %116 = vadd.xlane.f32.xlu0 %v115
    %v117 = vpop.xlane.xlu0 %116
    %v120 = vlaneseq
    %v121 = vand.u32 %v120, 127
    %v122 = vperm.slane %v114, %v121
    %v123 = vperm.slane %v117, %v121
    %vm124 = vcmask 1041409
    %v125 = vsel %vm124, %v123, %v122
    %vm127 = vcmask 58368
    %v128 = vsel %vm127, %v125, -inf
    %129 = vmax.xlane.f32.xlu0 %v128
    %v130 = vpop.xlane.xlu0 %129
    %v132 = vperm.slane %v130, 0
    %v133 = vperm.slane %v130, 1
    %v136 = vsub.f32 %v114, %v132
    %v137 = vsub.f32 %v117, %v133
    %v138 = vmul.f32 %v136, 1.442695
    %v139 = vpow.pop %v138
    %v140 = vmul.f32 %v137, 1.442695
    %v141 = vpow.pop %v140
    %144 = vset.pattern.permute.xlu0 0
    %145 = vperm.xlu0 %144, %v139
    %v146 = vpop.permute.xlu0 %145
    %147 = vset.pattern.permute.xlu0 0
    %148 = vperm.xlu0 %147, %v141
    %v149 = vpop.permute.xlu0 %148
    %v150 = vperm.slane %v146, %v121
    %v151 = vperm.slane %v149, %v121
    %v152 = vsel %vm124, %v151, %v150
    %v154 = vsel %vm127, %v152, 0.0
    %155 = vadd.xlane.f32.xlu0 %v154
    %v156 = vpop.xlane.xlu0 %155
    %v157 = vrcp.pop %v156
    %v158 = vmul.f32 %v156, %v157
    %v159 = vsub.f32 2.0, %v158
    %v160 = vmul.f32 %v157, %v159
    %v162 = vperm.slane %v160, 0
    %v163 = vperm.slane %v160, 1
    %v166 = vmul.f32 %v139, %v162
    %v167 = vmul.f32 %v141, %v163
    %169 = vset.pattern.permute.xlu0 0
    %170 = vperm.xlu0 %169, %v166
    %v171 = vpop.permute.xlu0 %170
    %174 = vset.pattern.permute.xlu0 0
    %175 = vperm.xlu0 %174, %v167
    %v176 = vpop.permute.xlu0 %175
    %v178 = vmul.f32 %v27, %v171
    %v179 = vmul.f32 %v28, %v176
    %v180 = vsel %vm33, %v178, 0.0
    %v181 = vrot.slane %v180, 4
    %v182 = vadd.f32 %v180, %v181
    %v183 = vrot.slane %v182, 2
    %v184 = vadd.f32 %v182, %v183
    %v185 = vrot.slane %v184, 1
    %v186 = vadd.f32 %v184, %v185
    %v187 = vsel %vm33, %v179, 0.0
    %v188 = vrot.slane %v187, 4
    %v189 = vadd.f32 %v187, %v188
    %v190 = vrot.slane %v189, 2
    %v191 = vadd.f32 %v189, %v190
    %v192 = vrot.slane %v191, 1
    %v193 = vadd.f32 %v191, %v192
    %v196 = vsel %vm124, %v193, %v186
    %vm198 = vcmask 254976
    %199 = vst.msk [vmem:[#allocation2] sm:$0x3] %vm198, %v196
    %v200 = vperm.slane %v171, %v121
    %v201 = vperm.slane %v176, %v121
    %v202 = vsel %vm124, %v201, %v200
    %204 = vst.msk [vmem:[#allocation4] sm:$0x3] %vm127, %v202
    // Predicated region
    $region26: #{tpu_custom_call.1} parent=1 // pred_check
      _
    $region27: #{tpu_custom_call.1} parent=1 // pred_check_branch
      %206 = sbr.rel (0) target = $region29
    $region28: #{tpu_custom_call.1} parent=1 // pred_region
      %208 = vsyncadd [#allocation3], 0
      %s210 = sshll.u32 [#allocation2], 4
      %s211 = int_to_ptr.vmem [resolvable:$true] %s210
      %s212 = sshll.u32 %s6, 4
      %s213 = int_to_ptr.hbm [resolvable:$true] %s212
      %215 = dma.vmem_to_hbm [thread:$0]  %s211, 32, %s213, [#allocation3]
    $region29: #{tpu_custom_call.1} parent=1 // pred_fallthru
      _
    // Predicated region
    $region30: #{tpu_custom_call.1} parent=1 // pred_check
      _
    $region31: #{tpu_custom_call.1} parent=1 // pred_check_branch
      %217 = sbr.rel (0) target = $region33
    $region32: #{tpu_custom_call.1} parent=1 // pred_region
      %219 = vsyncadd [#allocation5], 0
      %s221 = sshll.u32 [#allocation4], 4
      %s222 = int_to_ptr.vmem [resolvable:$true] %s221
      %s223 = sshll.u32 %s7, 4
      %s224 = int_to_ptr.hbm [resolvable:$true] %s223
      %226 = dma.vmem_to_hbm [thread:$0]  %s222, 32, %s224, [#allocation5]
    $region33: #{tpu_custom_call.1} parent=1 // pred_fallthru
      _
    // Predicated region
    $region34: #{tpu_custom_call.1} parent=1 // pred_check
      _
    $region35: #{tpu_custom_call.1} parent=1 // pred_check_branch
      %228 = sbr.rel (0) target = $region37
    $region36: #{tpu_custom_call.1} parent=1 // pred_region
      %230 = dma.done [#allocation3], 32
    $region37: #{tpu_custom_call.1} parent=1 // pred_fallthru
      _
    // Predicated region
    $region38: #{tpu_custom_call.1} parent=1 // pred_check
      _
    $region39: #{tpu_custom_call.1} parent=1 // pred_check_branch
      %232 = sbr.rel (0) target = $region41
    $region40: #{tpu_custom_call.1} parent=1 // pred_region
      %234 = dma.done [#allocation5], 32
    $region41: #{tpu_custom_call.1} parent=1 // pred_fallthru
      _
    %235 = vsyncpa [#allocation3], 1
    %236 = vsyncpa [#allocation5], 1

</llo_original>
